<compile_context>
chip_gen: v5e
topology: v5e:2x2
jax: 0.10.0
libtpu: 0.0.40
codegen_flags: <defaults>
</compile_context>

<pallas_src>
import jax
import jax.numpy as jnp
from jax import lax
from jax.experimental import pallas as pl
from jax.experimental.pallas import tpu as pltpu

EPS_IN = 1e-5          # nn.InstanceNorm2d eps
NEG_SLOPE = 0.2        # nn.LeakyReLU(0.2)


def _round_up(x, m):
    return (x + m - 1) // m * m


# ---------------------------------------------------------------------------
# Fused kernel: strided conv (merged or 4-tap matmul) + InstanceNorm + LeakyReLU
# ---------------------------------------------------------------------------
def _make_kernel(ho, wo, coutp, cin, normalize, merge_taps):
    wop = wo + 1                # padded output width (last column is junk)
    mp = ho * wop               # output rows written per sample
    inv_count = 1.0 / float(ho * wo)
    tap_offsets = (0, 1, wop, wop + 1)   # (di, dj) in {0,1}^2 -> di*wop + dj

    def kernel(x_ref, w_ref, o_ref):
        # x_ref: (1, rows_in, 4*Cin)  bf16 space-to-depth input, one sample
        # w_ref: (16*Cin, Coutp) bf16  [merged]   or (4, 4*Cin, Coutp) bf16
        # o_ref: (1, mp, Coutp)  f32
        if merge_taps:
            # One K=16*Cin matmul: concat the 4 sublane-shifted slices along
            # lanes (VMEM only — no HBM im2col blow-up).
            # TODO(synk): if the unaligned-offset slices materialise copies in
            # the bundle dump, build the shifted operand via pltpu.roll instead.
            xcat = jnp.concatenate(
                [x_ref[0, pl.ds(off, mp), :] for off in tap_offsets], axis=1)
            acc = jnp.dot(xcat, w_ref[...],
                          preferred_element_type=jnp.float32)
        else:
            acc = jnp.zeros((mp, coutp), jnp.float32)
            for t, off in enumerate(tap_offsets):
                acc = acc + jnp.dot(x_ref[0, pl.ds(off, mp), :], w_ref[t],
                                    preferred_element_type=jnp.float32)

        if normalize:
            # Zero the junk padded column once, then plain sum / sum-of-squares
            # over all mp rows; divide by the true Ho*Wo pixel count.
            col = jax.lax.broadcasted_iota(jnp.int32, (mp, 1), 0) % wop
            acc = jnp.where(col < wo, acc, 0.0)
            s1 = jnp.sum(acc, axis=0, keepdims=True)
            s2 = jnp.sum(acc * acc, axis=0, keepdims=True)
            mean = s1 * inv_count
            var = jnp.maximum(s2 * inv_count - mean * mean, 0.0)
            acc = (acc - mean) * jax.lax.rsqrt(var + EPS_IN)

        o_ref[0] = jnp.where(acc >= 0.0, acc, NEG_SLOPE * acc)   # LeakyReLU

    return kernel, mp, wop


# ---------------------------------------------------------------------------
# Public wrapper: NCHW in / NCHW out (matches the PyTorch module).
# ---------------------------------------------------------------------------
def unet_down_forward(x_nchw, w_oihw, normalize=True):
    """UNetDown forward.  x: (N, Cin, H, W); w: (Cout, Cin, 4, 4)."""
    n, cin, h, w = x_nchw.shape
    cout = w_oihw.shape[0]
    assert h % 2 == 0 and w % 2 == 0, "H and W must be even"
    ho, wo = h // 2, w // 2
    coutp = _round_up(cout, 128)          # lane-dense (>=128) output stores
    merge_taps = (4 * cin) < 256          # one K=16*Cin matmul fits MXU depth

    kernel, mp, wop = _make_kernel(ho, wo, coutp, cin, normalize, merge_taps)

    # --- input layout (~1x bytes, bf16): NCHW -> padded NHWC -> space-to-depth
    x = jnp.transpose(x_nchw.astype(jnp.bfloat16), (0, 2, 3, 1))  # NHWC bf16
    xp = jnp.pad(x, ((0, 0), (1, 1), (1, 1), (0, 0)))             # conv pad = 1
    # s2d[n, i*(wo+1)+j, (2a+b)*Cin + c] = xp[n, 2i+a, 2j+b, c]
    s2d = xp.reshape(n, ho + 1, 2, wop, 2, cin)
    s2d = jnp.transpose(s2d, (0, 1, 3, 2, 4, 5))
    s2d = s2d.reshape(n, (ho + 1) * wop, 4 * cin)
    # +8 zero rows so the (di,dj)=(1,1) tap slice never reads out of bounds.
    s2d = jnp.pad(s2d, ((0, 0), (0, 8), (0, 0)))
    rows_in = s2d.shape[1]

    # --- conv weights: one (4*Cin, Cout) matrix per tap (di, dj), bf16,
    #     Cout padded with zero columns to Coutp for unmasked lane stores.
    taps = []
    for di in range(2):
        for dj in range(2):
            blocks = [w_oihw[:, :, 2 * di + a, 2 * dj + b].T       # (Cin, Cout)
                      for a in range(2) for b in range(2)]
            taps.append(jnp.concatenate(blocks, axis=0))           # (4*Cin, Cout)
    w_taps = jnp.stack(taps)                                       # (4, 4*Cin, Cout)
    w_taps = jnp.pad(w_taps, ((0, 0), (0, 0), (0, coutp - cout)))
    w_taps = w_taps.astype(jnp.bfloat16)
    if merge_taps:
        w_taps = w_taps.reshape(16 * cin, coutp)

    # Grid-invariant weight: single-buffer it (index map is constant), so the
    # deep 512->512 layers don't carry a duplicate weight slab in VMEM.
    spec_kw = {"pipeline_mode": pl.Buffered(1)} if hasattr(pl, "Buffered") else {}
    if merge_taps:
        w_spec = pl.BlockSpec((16 * cin, coutp), lambda i: (0, 0), **spec_kw)
    else:
        w_spec = pl.BlockSpec((4, 4 * cin, coutp), lambda i: (0, 0, 0), **spec_kw)

    # --- per-layer VMEM budget from actual slab sizes (with headroom) ---
    in_blk = rows_in * 4 * cin * 2            # bf16 input block
    w_blk = w_taps.size * 2                   # bf16 weights
    out_blk = mp * coutp * 4                  # f32 output block
    tmps = mp * 16 * cin * 2 + 2 * mp * coutp * 4
    est = 2 * in_blk + 2 * w_blk + 2 * out_blk + tmps + (4 << 20)
    vmem_limit = int(min(max(est, 8 << 20), 64 << 20))

    flops = 2 * n * ho * wo * (16 * cin) * coutp
    bytes_accessed = s2d.size * 2 + w_taps.size * 2 + n * mp * coutp * 4

    out = pl.pallas_call(
        kernel,
        out_shape=jax.ShapeDtypeStruct((n, mp, coutp), jnp.float32),
        grid=(n,),
        in_specs=[pl.BlockSpec((1, rows_in, 4 * cin), lambda i: (i, 0, 0)),
                  w_spec],
        out_specs=pl.BlockSpec((1, mp, coutp), lambda i: (i, 0, 0)),
        compiler_params=pltpu.CompilerParams(
            dimension_semantics=("parallel",),
            vmem_limit_bytes=vmem_limit),
        cost_estimate=pl.CostEstimate(flops=flops, transcendentals=0,
                                      bytes_accessed=bytes_accessed),
    )(s2d, w_taps)

    # Strip the junk padded column and the channel padding; back to NCHW.
    y = out.reshape(n, ho, wop, coutp)[:, :, :wo, :cout]
    return jnp.transpose(y, (0, 3, 1, 2))


# ---------------------------------------------------------------------------
# Pure-JAX reference (no Pallas) for verification.
# ---------------------------------------------------------------------------
def reference_forward(x_nchw, w_oihw, normalize=True):
    y = lax.conv_general_dilated(
        x_nchw, w_oihw, window_strides=(2, 2), padding=[(1, 1), (1, 1)],
        dimension_numbers=('NCHW', 'OIHW', 'NCHW'),
        precision=jax.lax.Precision.HIGHEST)
    if normalize:
        mean = y.mean(axis=(2, 3), keepdims=True)
        var = jnp.square(y - mean).mean(axis=(2, 3), keepdims=True)
        y = (y - mean) * jax.lax.rsqrt(var + EPS_IN)
    return jnp.where(y >= 0.0, y, NEG_SLOPE * y)


if __name__ == "__main__":
    N, in_size, out_size, H, W = 2, 4, 16, 16, 16

    key = jax.random.PRNGKey(0)
    kx, kw = jax.random.split(key)
    x = jax.random.normal(kx, (N, in_size, H, W), jnp.float32)
    wgt = 0.25 * jax.random.normal(kw, (out_size, in_size, 4, 4), jnp.float32)

    fwd = jax.jit(unet_down_forward)
    out = jax.block_until_ready(fwd(x, wgt))
    ref = jax.block_until_ready(reference_forward(x, wgt))

    assert out.shape == (N, out_size, H // 2, W // 2), out.shape
    # bf16 MXU operands with f32 accumulation -> relaxed tolerance vs f32 ref.
    if not jnp.allclose(out, ref, rtol=5e-2, atol=5e-2):
        raise AssertionError(
            f"mismatch, max abs err = {jnp.max(jnp.abs(out - ref))}")
    print("KERNEL_OK")
</pallas_src>

<mosaic_0001>
module attributes {stable_mosaic.version = 11 : i64} {
  func.func @kernel(%arg0: i32, %arg1: memref<1x89x16xbf16, #tpu.memory_space<vmem>>, %arg2: memref<64x128xbf16, #tpu.memory_space<vmem>>, %arg3: memref<1x72x128xf32, #tpu.memory_space<vmem>>) attributes {dimension_semantics = [#tpu.dimension_semantics<parallel>], iteration_bounds = array<i64: 2>, scalar_prefetch = 0 : i64, scratch_operands = 0 : i64, tpu.core_type = #tpu.core_type<tc>, window_params = [{transform_indices = @transform_0, window_bounds = array<i64: 1, 89, 16>}, {pipeline_mode = #tpu.pipeline_mode<synchronous>, transform_indices = @transform_1, window_bounds = array<i64: 64, 128>}, {transform_indices = @transform_2, window_bounds = array<i64: 1, 72, 128>}]} {
    %c0 = arith.constant 0 : index
    %c0_0 = arith.constant 0 : index
    %c0_1 = arith.constant 0 : index
    %0 = vector.load %arg1[%c0, %c0_0, %c0_1] : memref<1x89x16xbf16, #tpu.memory_space<vmem>>, vector<1x72x16xbf16>
    %1 = vector.shape_cast %0 : vector<1x72x16xbf16> to vector<72x16xbf16>
    %c0_2 = arith.constant 0 : index
    %c1 = arith.constant 1 : index
    %c0_3 = arith.constant 0 : index
    %2 = vector.load %arg1[%c0_2, %c1, %c0_3] : memref<1x89x16xbf16, #tpu.memory_space<vmem>>, vector<1x72x16xbf16>
    %3 = vector.shape_cast %2 : vector<1x72x16xbf16> to vector<72x16xbf16>
    %c0_4 = arith.constant 0 : index
    %c9 = arith.constant 9 : index
    %c0_5 = arith.constant 0 : index
    %4 = vector.load %arg1[%c0_4, %c9, %c0_5] : memref<1x89x16xbf16, #tpu.memory_space<vmem>>, vector<1x72x16xbf16>
    %5 = vector.shape_cast %4 : vector<1x72x16xbf16> to vector<72x16xbf16>
    %c0_6 = arith.constant 0 : index
    %c10 = arith.constant 10 : index
    %c0_7 = arith.constant 0 : index
    %6 = vector.load %arg1[%c0_6, %c10, %c0_7] : memref<1x89x16xbf16, #tpu.memory_space<vmem>>, vector<1x72x16xbf16>
    %7 = vector.shape_cast %6 : vector<1x72x16xbf16> to vector<72x16xbf16>
    %8 = tpu.concatenate %1, %3, %5, %7 in 1 : vector<72x16xbf16>, vector<72x16xbf16>, vector<72x16xbf16>, vector<72x16xbf16> -> vector<72x64xbf16>
    %c0_8 = arith.constant 0 : index
    %c0_9 = arith.constant 0 : index
    %9 = vector.load %arg2[%c0_8, %c0_9] : memref<64x128xbf16, #tpu.memory_space<vmem>>, vector<64x128xbf16>
    %cst = arith.constant dense<0.000000e+00> : vector<72x128xf32>
    %10 = tpu.matmul %8, %9, %cst {dimension_numbers = #tpu.dot_dimension_numbers<[1], [0], [0], [1], [0, 0, 1, 1], [], []>} : vector<72x64xbf16>, vector<64x128xbf16>, vector<72x128xf32> -> vector<72x128xf32>
    %11 = tpu.iota {dimensions = array<i32: 0>} : vector<72x1xi32>
    %c9_i32 = arith.constant 9 : i32
    %c0_i32 = arith.constant 0 : i32
    %12 = arith.cmpi eq, %c9_i32, %c0_i32 : i32
    %c1_i32 = arith.constant 1 : i32
    %13 = arith.select %12, %c1_i32, %c9_i32 : i32
    %14 = vector.broadcast %13 : i32 to vector<72x1xi32>
    %15 = arith.remsi %11, %14 : vector<72x1xi32>
    %c0_i32_10 = arith.constant 0 : i32
    %16 = vector.broadcast %c0_i32_10 : i32 to vector<72x1xi32>
    %17 = arith.cmpi ne, %15, %16 : vector<72x1xi32>
    %c0_i32_11 = arith.constant 0 : i32
    %18 = vector.broadcast %c0_i32_11 : i32 to vector<72x1xi32>
    %19 = arith.cmpi slt, %15, %18 : vector<72x1xi32>
    %c0_i32_12 = arith.constant 0 : i32
    %20 = arith.cmpi slt, %13, %c0_i32_12 : i32
    %21 = vector.broadcast %20 : i1 to vector<72x1xi1>
    %22 = vector.broadcast %21 : vector<72x1xi1> to vector<72x1xi1>
    %23 = arith.xori %19, %22 : vector<72x1xi1>
    %24 = arith.andi %23, %17 : vector<72x1xi1>
    %25 = vector.broadcast %13 : i32 to vector<72x1xi32>
    %26 = arith.addi %15, %25 : vector<72x1xi32>
    %27 = arith.select %24, %26, %15 : vector<72x1xi1>, vector<72x1xi32>
    %c8_i32 = arith.constant 8 : i32
    %28 = vector.broadcast %c8_i32 : i32 to vector<72x1xi32>
    %29 = arith.cmpi slt, %27, %28 : vector<72x1xi32>
    %cst_13 = arith.constant 0.000000e+00 : f32
    %30 = vector.shape_cast %29 : vector<72x1xi1> to vector<72x1xi1>
    %31 = vector.broadcast %30 : vector<72x1xi1> to vector<72x128xi1>
    %32 = vector.broadcast %cst_13 : f32 to vector<72x128xf32>
    %33 = arith.select %31, %10, %32 : vector<72x128xi1>, vector<72x128xf32>
    %cst_14 = arith.constant dense<0.000000e+00> : vector<128xf32>
    %34 = vector.multi_reduction <add>, %33, %cst_14 [0] : vector<72x128xf32> to vector<128xf32>
    %35 = vector.shape_cast %34 : vector<128xf32> to vector<1x128xf32>
    %36 = arith.mulf %33, %33 : vector<72x128xf32>
    %cst_15 = arith.constant dense<0.000000e+00> : vector<128xf32>
    %37 = vector.multi_reduction <add>, %36, %cst_15 [0] : vector<72x128xf32> to vector<128xf32>
    %38 = vector.shape_cast %37 : vector<128xf32> to vector<1x128xf32>
    %cst_16 = arith.constant 1.562500e-02 : f32
    %39 = vector.broadcast %cst_16 : f32 to vector<1x128xf32>
    %40 = arith.mulf %35, %39 : vector<1x128xf32>
    %cst_17 = arith.constant 1.562500e-02 : f32
    %41 = vector.broadcast %cst_17 : f32 to vector<1x128xf32>
    %42 = arith.mulf %38, %41 : vector<1x128xf32>
    %43 = arith.mulf %40, %40 : vector<1x128xf32>
    %44 = arith.subf %42, %43 : vector<1x128xf32>
    %cst_18 = arith.constant 0.000000e+00 : f32
    %45 = vector.broadcast %cst_18 : f32 to vector<1x128xf32>
    %46 = arith.maximumf %44, %45 : vector<1x128xf32>
    %47 = vector.broadcast %40 : vector<1x128xf32> to vector<72x128xf32>
    %48 = arith.subf %33, %47 : vector<72x128xf32>
    %cst_19 = arith.constant 9.99999974E-6 : f32
    %49 = vector.broadcast %cst_19 : f32 to vector<1x128xf32>
    %50 = arith.addf %46, %49 : vector<1x128xf32>
    %51 = math.rsqrt %50 : vector<1x128xf32>
    %52 = vector.broadcast %51 : vector<1x128xf32> to vector<72x128xf32>
    %53 = arith.mulf %48, %52 : vector<72x128xf32>
    %cst_20 = arith.constant 0.000000e+00 : f32
    %54 = vector.broadcast %cst_20 : f32 to vector<72x128xf32>
    %55 = arith.cmpf oge, %53, %54 : vector<72x128xf32>
    %cst_21 = arith.constant 2.000000e-01 : f32
    %56 = vector.broadcast %cst_21 : f32 to vector<72x128xf32>
    %57 = arith.mulf %56, %53 : vector<72x128xf32>
    %58 = arith.select %55, %53, %57 : vector<72x128xi1>, vector<72x128xf32>
    %c0_22 = arith.constant 0 : index
    %c0_23 = arith.constant 0 : index
    %c0_24 = arith.constant 0 : index
    %59 = vector.load %arg3[%c0_22, %c0_23, %c0_24] : memref<1x72x128xf32, #tpu.memory_space<vmem>>, vector<1x72x128xf32>
    %60 = vector.shape_cast %59 : vector<1x72x128xf32> to vector<72x128xf32>
    %61 = vector.shape_cast %58 : vector<72x128xf32> to vector<1x72x128xf32>
    tpu.vector_store %arg3[%c0_22, %c0_23, %c0_24], %61 {strides = array<i32>} : memref<1x72x128xf32, #tpu.memory_space<vmem>>, vector<1x72x128xf32>,
    return
  }
  func.func @transform_0(%arg0: i32) -> (i32, i32, i32) {
    %c0_i32 = arith.constant 0 : i32
    %c0_i32_0 = arith.constant 0 : i32
    %c0_i32_1 = arith.constant 0 : i32
    return %arg0, %c0_i32, %c0_i32_0 : i32, i32, i32
  }
  func.func @transform_1(%arg0: i32) -> (i32, i32) {
    %c0_i32 = arith.constant 0 : i32
    %c0_i32_0 = arith.constant 0 : i32
    %c0_i32_1 = arith.constant 0 : i32
    return %c0_i32, %c0_i32_0 : i32, i32
  }
  func.func @transform_2(%arg0: i32) -> (i32, i32, i32) {
    %c0_i32 = arith.constant 0 : i32
    %c0_i32_0 = arith.constant 0 : i32
    %c0_i32_1 = arith.constant 0 : i32
    return %arg0, %c0_i32, %c0_i32_0 : i32, i32, i32
  }
}

</mosaic_0001>

<llo_original>
// kernel: unet_down_forward.1
$region0: #{unet_down_forward.1}
  #allocation0 [shape = 'u32[]', space=smem, size = 0x4, offset = 0x4, fixed_abs, tag = 'smem constant byte address 0x4 - core index']
  #allocation1 [shape = 'u32[72,128]{1,0:T(1,128)}', space=vmem, size = 0x9000, scoped, tag = 'internal scratch']
  %s0 = inlined_call_operand.vmem [shape: bf16[2,89,16], index: 0, kind: input, shape index: {}]
  %s1 = inlined_call_operand.vmem [shape: bf16[64,128], index: 1, kind: input, shape index: {}]
  %s2 = inlined_call_operand.vmem [shape: f32[2,72,128], index: 2, kind: output, shape index: {}]
  %s3 = sld [smem:[#allocation0]]
  $region41: #{unet_down_forward.1} parent=0
    _
  %s5 = ssub.s32 1, %s3
  %s6 = scalar_select 0, %s5, %s3
  loop: start=0, step=1, limit=4
  $region2: #{unet_down_forward.1} parent=0 // loop_pre_header
    _
  $region3: #{unet_down_forward.1} parent=0 // loop_header
    %s8 = sphi 0, %s12
    %p9 = scmp.ge.s32.totalorder %s8, 4
    %s18 = sphi 0, %s20
    %s21 = sphi 0, %s18
    %s22 = sphi 0, %s21
    %s38 = sphi 0, %s22
    %s42 = sphi 0, %s42
    %s44 = sphi 0, %s42
    %s45 = sphi 0, %s44
    %s59 = sphi 0, %s45
    %s65 = sphi 0, %s67
    %s68 = sphi 0, %s65
    %s69 = sphi 0, %s68
    %s85 = sphi 0, %s69
  $region4: #{unet_down_forward.1} parent=0 // loop_header_branch
    %11 = sbr.rel (%p9) target = $region8
  $region5: #{unet_down_forward.1} parent=0 // loop_body
    %s13 = ssub.s32 %s8, 1
    %s14 = ssub.s32 %s8, 2
    %s15 = sadd.s32 %s8, 1
    %s16 = ssub.s32 %s8, %s15
    %p17 = scmp.eq.s32.totalorder %s16, 0
    %s19 = sadd.s32 %s18, 1
    %s20 = scalar_select %p17, %s18, %s19
    %p23 = pneg %p17
    %p24 = scmp.eq.s32.totalorder %s8, 1
    %p25 = por %p23, %p24
    %p26 = scmp.ne.s32.totalorder %s18, %s21
    %p27 = scmp.eq.s32.totalorder %s8, 0
    %p28 = por %p26, %p27
    %p29 = scmp.ne.s32.totalorder %s18, %s21
    %p30 = scmp.eq.s32.totalorder %s13, 1
    %p31 = por %p29, %p30
    %p32 = scmp.ne.s32.totalorder %s21, %s22
    %p33 = scmp.eq.s32.totalorder %s13, 0
    %p34 = por %p32, %p33
    %p35 = scmp.ne.s32.totalorder %s21, %s22
    %p36 = scmp.eq.s32.totalorder %s14, 1
    %p37 = por %p35, %p36
    %p39 = scmp.ne.s32.totalorder %s22, %s38
    %p40 = scmp.eq.s32.totalorder %s14, 0
    %p41 = por %p39, %p40
    %s43 = sadd.s32 %s42, 1
    %p46 = scmp.eq.s32.totalorder %s8, 1
    %p47 = scmp.ne.s32.totalorder %s42, %s44
    %p48 = scmp.eq.s32.totalorder %s8, 0
    %p49 = por %p47, %p48
    %p50 = scmp.ne.s32.totalorder %s42, %s44
    %p51 = scmp.eq.s32.totalorder %s13, 1
    %p52 = por %p50, %p51
    %p53 = scmp.ne.s32.totalorder %s44, %s45
    %p54 = scmp.eq.s32.totalorder %s13, 0
    %p55 = por %p53, %p54
    %p56 = scmp.ne.s32.totalorder %s44, %s45
    %p57 = scmp.eq.s32.totalorder %s14, 1
    %p58 = por %p56, %p57
    %p60 = scmp.ne.s32.totalorder %s45, %s59
    %p61 = scmp.eq.s32.totalorder %s14, 0
    %p62 = por %p60, %p61
    %s63 = ssub.s32 %s8, %s15
    %p64 = scmp.eq.s32.totalorder %s63, 0
    %s66 = sadd.s32 %s65, 1
    %s67 = scalar_select %p64, %s65, %s66
    %p70 = pneg %p64
    %p71 = scmp.eq.s32.totalorder %s8, 1
    %p72 = por %p70, %p71
    %p73 = scmp.ne.s32.totalorder %s65, %s68
    %p74 = scmp.eq.s32.totalorder %s8, 0
    %p75 = por %p73, %p74
    %p76 = scmp.ne.s32.totalorder %s65, %s68
    %p77 = scmp.eq.s32.totalorder %s13, 1
    %p78 = por %p76, %p77
    %p79 = scmp.ne.s32.totalorder %s68, %s69
    %p80 = scmp.eq.s32.totalorder %s13, 0
    %p81 = por %p79, %p80
    %p82 = scmp.ne.s32.totalorder %s68, %s69
    %p83 = scmp.eq.s32.totalorder %s14, 1
    %p84 = por %p82, %p83
    %p86 = scmp.ne.s32.totalorder %s69, %s85
    %p87 = scmp.eq.s32.totalorder %s14, 0
    %p88 = por %p86, %p87
    %p89 = scmp.le.s32.totalorder 1, %s8
    %p90 = scmp.lt.s32.totalorder %s8, 3
    %p91 = pnand %p89, %p90
    %p92 = pneg %p91
    // Predicated region
    $region9: #{unet_down_forward.1} parent=5 // pred_check
      _
    $region10: #{unet_down_forward.1} parent=5 // pred_check_branch
      %94 = sbr.rel (%p91) target = $region12
    $region11: #{unet_down_forward.1} parent=5 // pred_region
      %s95 = ssub.s32 %s8, 1
      // Predicated region
      $region13: #{unet_down_forward.1} parent=11 // pred_check
        %p96 = pneg %p55
      $region14: #{unet_down_forward.1} parent=11 // pred_check_branch
        %98 = sbr.rel (%p96) target = $region16
      $region15: #{unet_down_forward.1} parent=11 // pred_region
        _
      $region16: #{unet_down_forward.1} parent=11 // pred_fallthru
        _
    $region12: #{unet_down_forward.1} parent=5 // pred_fallthru
      _
    %p99 = scmp.lt.s32.totalorder %s8, 2
    // Predicated region
    $region17: #{unet_down_forward.1} parent=5 // pred_check
      %p100 = pneg %p99
    $region18: #{unet_down_forward.1} parent=5 // pred_check_branch
      %102 = sbr.rel (%p100) target = $region20
    $region19: #{unet_down_forward.1} parent=5 // pred_region
      // Predicated region
      $region21: #{unet_down_forward.1} parent=19 // pred_check
        %p103 = pneg %p28
      $region22: #{unet_down_forward.1} parent=19 // pred_check_branch
        %105 = sbr.rel (%p103) target = $region24
      $region23: #{unet_down_forward.1} parent=19 // pred_region
        %p106 = scmp.lt.s32.totalorder %s8, 1
        %s107 = scalar_select %p106, %s8, 1
        %s108 = smul.addr %s107, 12
        %s109 = smul.addr %s108, 4
        %s110 = scalar_lea.vmem %s0, %s109
      $region24: #{unet_down_forward.1} parent=19 // pred_fallthru
        _
    $region20: #{unet_down_forward.1} parent=5 // pred_fallthru
      _
    %p111 = scmp.le.s32.totalorder 1, %s8
    %p112 = scmp.lt.s32.totalorder %s8, 3
    %p113 = pnand %p111, %p112
    %p114 = pneg %p113
    // Predicated region
    $region25: #{unet_down_forward.1} parent=5 // pred_check
      _
    $region26: #{unet_down_forward.1} parent=5 // pred_check_branch
      %116 = sbr.rel (%p113) target = $region28
    $region27: #{unet_down_forward.1} parent=5 // pred_region
      %s117 = ssub.s32 %s8, 1
      %p118 = scmp.lt.s32.totalorder %s13, 1
      %s119 = scalar_select %p118, %s13, 1
      %s120 = smul.addr %s119, 12
      %s121 = smul.addr %s120, 4
      %s122 = scalar_lea.vmem %s0, %s121
      %p123 = pneg %p34
      %p124 = pneg %p31
      %p125 = pneg %p55
      %p126 = pneg %p52
      %p127 = pneg %p81
      %p128 = pneg %p78
      %p129 = scmp.lt.s32.totalorder %s13, 1
      %s130 = scalar_select %p129, %s13, 1
      %s131 = smul.addr %s130, 9
      %s132 = smul.addr %s131, 8
      %s133 = scalar_lea.vmem %s2, %s132
      %p134 = scmp.lt.s32.totalorder %s13, 1
      %s135 = scalar_select %p134, %s13, 1
      %s136 = smul.addr %s135, 12
      %s137 = smul.addr %s136, 4
      %s138 = scalar_lea.vmem %s0, %s137
      %p139 = scmp.lt.s32.totalorder %s13, 1
      %s140 = scalar_select %p139, %s13, 1
      %s141 = smul.addr %s140, 9
      %s142 = smul.addr %s141, 8
      %s143 = scalar_lea.vmem %s2, %s142
      %v145 = vld [vmem:[%s138] sm:$0xf]
      %v146 = vld [vmem:[%s138 + $0x4] sm:$0xf]
      %v147 = vld [vmem:[%s138 + $0x8] sm:$0xf]
      %v148 = vld [vmem:[%s138 + $0xc] sm:$0xf]
      %v149 = vld [vmem:[%s138 + $0x10] sm:$0xf]
      %v150 = vld [vmem:[%s138 + $0x14] sm:$0xf]
      %v151 = vld [vmem:[%s138 + $0x18] sm:$0xf]
      %v152 = vld [vmem:[%s138 + $0x1c] sm:$0xf]
      %v153 = vld [vmem:[%s138 + $0x20] sm:$0xf]
      %v154 = vld [vmem:[%s138 + $0x24] sm:$0x1]
      %v155 = vld [vmem:[%s138 + $0x24] sm:$0xf]
      %v156 = vld [vmem:[%s138 + $0x28] sm:$0x1]
      %v157 = vld [vmem:[%s138 + $0x4] sm:$0xe]
      %v167 = vunpack.c.l.b16 %v145
      %v168 = vunpack.c.l.b16 %v146
      %v169 = vunpack.c.l.b16 %v147
      %v170 = vunpack.c.l.b16 %v148
      %v171 = vunpack.c.l.b16 %v149
      %v172 = vunpack.c.l.b16 %v150
      %v173 = vunpack.c.l.b16 %v151
      %v174 = vunpack.c.l.b16 %v152
      %v175 = vunpack.c.l.b16 %v153
      %v176 = vpack.c.b16 %v168, %v167
      %v177 = vpack.c.b16 %v170, %v169
      %v178 = vpack.c.b16 %v172, %v171
      %v179 = vpack.c.b16 %v174, %v173
      %v180 = vpack.c.b16 %v175, %v175
      %v182 = vunpack.c.l.b16 %v154
      %v183 = vpack.c.b16 %v182, %v175
      %vm184 = vsmask.f32 7424
      %v186 = vshrl.u32 %v176, 16
      %v188 = vshll.u32 %v176, 16
      %v190 = vrot.slane %v188, 1
      %v191 = vor.u32 %v186, %v190
      %v193 = vshll.u32 %v177, 16
      %v195 = vrot.slane %v193, 1
      %v196 = vsel %vm184, %v191, %v195
      %v197 = vshrl.u32 %v177, 16
      %v199 = vor.u32 %v197, %v195
      %v201 = vshll.u32 %v178, 16
      %v203 = vrot.slane %v201, 1
      %v204 = vsel %vm184, %v199, %v203
      %v205 = vshrl.u32 %v178, 16
      %v207 = vor.u32 %v205, %v203
      %v209 = vshll.u32 %v179, 16
      %v211 = vrot.slane %v209, 1
      %v212 = vsel %vm184, %v207, %v211
      %v213 = vshrl.u32 %v179, 16
      %v215 = vor.u32 %v213, %v211
      %v217 = vshll.u32 %v183, 16
      %v219 = vrot.slane %v217, 1
      %v220 = vsel %vm184, %v215, %v219
      %v221 = vshrl.u32 %v183, 16
      %v223 = vor.u32 %v221, %v219
      %224 = vrot.lane.b32.xlu0 %v196, 16
      %v225 = vpop.permute.xlu0 %224
      %226 = vrot.lane.b32.xlu0 %v204, 16
      %v227 = vpop.permute.xlu0 %226
      %228 = vrot.lane.b32.xlu0 %v212, 16
      %v229 = vpop.permute.xlu0 %228
      %230 = vrot.lane.b32.xlu0 %v220, 16
      %v231 = vpop.permute.xlu0 %230
      %232 = vrot.lane.b32.xlu0 %v223, 16
      %v233 = vpop.permute.xlu0 %232
      %v236 = vunpack.c.l.b16 %v155
      %v237 = vunpack.c.l.b16 %v156
      %v238 = vpack.c.b16 %v169, %v168
      %v239 = vpack.c.b16 %v171, %v170
      %v240 = vpack.c.b16 %v173, %v172
      %v241 = vpack.c.b16 %v175, %v174
      %v242 = vpack.c.b16 %v237, %v236
      %v244 = vshrl.u32 %v238, 16
      %v246 = vshll.u32 %v238, 16
      %v248 = vrot.slane %v246, 1
      %v249 = vor.u32 %v244, %v248
      %v251 = vshll.u32 %v239, 16
      %v253 = vrot.slane %v251, 1
      %v254 = vsel %vm184, %v249, %v253
      %v255 = vshrl.u32 %v239, 16
      %v257 = vor.u32 %v255, %v253
      %v259 = vshll.u32 %v240, 16
      %v261 = vrot.slane %v259, 1
      %v262 = vsel %vm184, %v257, %v261
      %v263 = vshrl.u32 %v240, 16
      %v265 = vor.u32 %v263, %v261
      %v267 = vshll.u32 %v241, 16
      %v269 = vrot.slane %v267, 1
      %v270 = vsel %vm184, %v265, %v269
      %v271 = vshrl.u32 %v241, 16
      %v273 = vor.u32 %v271, %v269
      %v275 = vshll.u32 %v242, 16
      %v277 = vrot.slane %v275, 1
      %v278 = vsel %vm184, %v273, %v277
      %v279 = vshrl.u32 %v242, 16
      %v281 = vor.u32 %v279, %v277
      %282 = vrot.lane.b32.xlu0 %v254, 32
      %v283 = vpop.permute.xlu0 %282
      %284 = vrot.lane.b32.xlu0 %v262, 32
      %v285 = vpop.permute.xlu0 %284
      %286 = vrot.lane.b32.xlu0 %v270, 32
      %v287 = vpop.permute.xlu0 %286
      %288 = vrot.lane.b32.xlu0 %v278, 32
      %v289 = vpop.permute.xlu0 %288
      %290 = vrot.lane.b32.xlu0 %v281, 32
      %v291 = vpop.permute.xlu0 %290
      %v293 = vunpack.c.l.b16 %v157
      %v294 = vpack.c.b16 %v169, %v293
      %vm295 = vcmask 1046528
      %v296 = vrot.slane %v294, 1
      %v297 = vrot.slane %v239, 1
      %v298 = vsel %vm295, %v296, %v297
      %v299 = vrot.slane %v240, 1
      %v300 = vsel %vm295, %v297, %v299
      %v301 = vrot.slane %v241, 1
      %v302 = vsel %vm295, %v299, %v301
      %v303 = vrot.slane %v242, 1
      %v304 = vsel %vm295, %v301, %v303
      %305 = vrot.lane.b32.xlu0 %v298, 48
      %v306 = vpop.permute.xlu0 %305
      %307 = vrot.lane.b32.xlu0 %v300, 48
      %v308 = vpop.permute.xlu0 %307
      %309 = vrot.lane.b32.xlu0 %v302, 48
      %v310 = vpop.permute.xlu0 %309
      %311 = vrot.lane.b32.xlu0 %v304, 48
      %v312 = vpop.permute.xlu0 %311
      %313 = vrot.lane.b32.xlu0 %v303, 48
      %v314 = vpop.permute.xlu0 %313
      %vm315 = vcmask 130048
      %v317 = vsel %vm315, %v176, %v225
      %v319 = vsel %vm315, %v177, %v227
      %v321 = vsel %vm315, %v178, %v229
      %v323 = vsel %vm315, %v179, %v231
      %v326 = vsel %vm315, %v180, %v233
      %vm327 = vcmask 261120
      %v329 = vsel %vm327, %v317, %v283
      %v331 = vsel %vm327, %v319, %v285
      %v333 = vsel %vm327, %v321, %v287
      %v335 = vsel %vm327, %v323, %v289
      %v337 = vsel %vm327, %v326, %v291
      %vm338 = vcmask 392192
      %v340 = vsel %vm338, %v329, %v306
      %v342 = vsel %vm338, %v331, %v308
      %v344 = vsel %vm338, %v333, %v310
      %v346 = vsel %vm338, %v335, %v312
      %v348 = vsel %vm338, %v337, %v314
      %v349 = vld [vmem:[%s1] sm:$0xf]
      %v350 = vld [vmem:[%s1 + $0x4] sm:$0xf]
      %v351 = vld [vmem:[%s1 + $0x8] sm:$0xf]
      %v352 = vld [vmem:[%s1 + $0xc] sm:$0xf]
      %v353 = vld [vmem:[%s1 + $0x10] sm:$0xf]
      %v354 = vld [vmem:[%s1 + $0x14] sm:$0xf]
      %v355 = vld [vmem:[%s1 + $0x18] sm:$0xf]
      %v356 = vld [vmem:[%s1 + $0x1c] sm:$0xf]
      %v365 = vunpack.c.l.b16 %v349
      %v366 = vunpack.c.l.b16 %v350
      %v367 = vunpack.c.l.b16 %v351
      %v368 = vunpack.c.l.b16 %v352
      %v369 = vunpack.c.l.b16 %v353
      %v370 = vunpack.c.l.b16 %v354
      %v371 = vunpack.c.l.b16 %v355
      %v372 = vunpack.c.l.b16 %v356
      %v373 = vpack.c.b16 %v366, %v365
      %v374 = vpack.c.b16 %v368, %v367
      %v375 = vpack.c.b16 %v370, %v369
      %v376 = vpack.c.b16 %v372, %v371
      %vm381 = vcmask 523264
      %v382 = vsel %vm381, %v340, 0
      %v384 = vsel %vm381, %v342, 0
      %v386 = vsel %vm381, %v344, 0
      %v388 = vsel %vm381, %v346, 0
      %v390 = vsel %vm381, %v348, 0
      %392 = vmatpush.bf16.msra.mxu0 0
      %393 = vmatpush.bf16.msra.mxu0 0
      %394 = vmatpush.bf16.msra.mxu0 0
      %395 = vmatpush.bf16.msra.mxu0 0
      %396 = vmatpush.bf16.msra.mxu0 %v376
      %397 = vmatpush.bf16.msra.mxu0 %v375
      %398 = vmatpush.bf16.msra.mxu0 %v374
      %399 = vmatpush.bf16.msra.mxu0 %v373
      %400 = vmatmul.bf16.gmra.mxu0 %v382
      %v401 = vpop.f32.mrf.mxu0
      %v402 = vadd.f32 0.0, %v401
      %v403 = vpop.f32.mrf.mxu0
      %v404 = vadd.f32 0.0, %v403
      %405 = vmatmul.bf16.gmra.mxu0 %v384
      %v406 = vpop.f32.mrf.mxu0
      %v407 = vadd.f32 0.0, %v406
      %v408 = vpop.f32.mrf.mxu0
      %v409 = vadd.f32 0.0, %v408
      %410 = vmatmul.bf16.gmra.mxu0 %v386
      %v411 = vpop.f32.mrf.mxu0
      %v412 = vadd.f32 0.0, %v411
      %v413 = vpop.f32.mrf.mxu0
      %v414 = vadd.f32 0.0, %v413
      %415 = vmatmul.bf16.gmra.mxu0 %v388
      %v416 = vpop.f32.mrf.mxu0
      %v417 = vadd.f32 0.0, %v416
      %v418 = vpop.f32.mrf.mxu0
      %v419 = vadd.f32 0.0, %v418
      %420 = vmatmul.bf16.gmra.mxu0 %v390
      %v421 = vpop.f32.mrf.mxu0
      %v422 = vadd.f32 0.0, %v421
      %v423 = vpop.f32.mrf.mxu0
      %424 = vdwg.mxu0
      %v425 = vlaneseq
      %v426 = vshrl.u32 %v425, 7
      %v427 = vadd.s32 %v426, 8
      %v428 = vadd.s32 %v426, 16
      %v429 = vadd.s32 %v426, 24
      %v430 = vadd.s32 %v426, 32
      %v431 = vadd.s32 %v426, 40
      %v432 = vadd.s32 %v426, 48
      %v433 = vadd.s32 %v426, 56
      %v434 = vadd.s32 %v426, 64
      %vm435 = vcmp.lt.s32.totalorder %v426, 0
      %v436 = vsub.s32 0, %v426
      %v437 = vsel %vm435, %v436, %v426
      %v438 = vand.u32 %v437, 65535
      %v439 = vshrl.u32 %v437, 16
      %v441 = vmul.u32 %v438, 14564
      %v442 = vmul.u32 %v438, 58254
      %v443 = vmul.u32 %v439, 14564
      %v444 = vmul.u32 %v439, 58254
      %v445 = vshll.u32 %v442, 16
      %v446 = vshrl.u32 %v442, 16
      %v447 = vshll.u32 %v443, 16
      %v448 = vshrl.u32 %v443, 16
      %vm449 = vc.u32 %v441, %v445
      %v450 = vsel %vm449, 1, 0
      %v451 = vadd.s32 %v441, %v445
      %v452 = vadd.s32 %v444, %v450
      %vm453 = vc.u32 %v451, %v447
      %v454 = vsel %vm453, 1, 0
      %v455 = vadd.s32 %v451, %v447
      %v456 = vadd.s32 %v452, %v454
      %v457 = vadd.s32 %v456, %v446
      %v458 = vadd.s32 %v457, %v448
      %v459 = vshrl.u32 %v458, 3
      %v460 = vmul.u32 %v459, 9
      %v461 = vsub.s32 %v437, %v460
      %v462 = vsub.s32 0, %v461
      %v463 = vsel %vm435, %v462, %v461
      %vm464 = vcmp.lt.s32.totalorder %v427, 0
      %v465 = vsub.s32 0, %v427
      %v466 = vsel %vm464, %v465, %v427
      %v467 = vand.u32 %v466, 65535
      %v468 = vshrl.u32 %v466, 16
      %v470 = vmul.u32 %v467, 14564
      %v471 = vmul.u32 %v467, 58254
      %v472 = vmul.u32 %v468, 14564
      %v473 = vmul.u32 %v468, 58254
      %v474 = vshll.u32 %v471, 16
      %v475 = vshrl.u32 %v471, 16
      %v476 = vshll.u32 %v472, 16
      %v477 = vshrl.u32 %v472, 16
      %vm478 = vc.u32 %v470, %v474
      %v479 = vsel %vm478, 1, 0
      %v480 = vadd.s32 %v470, %v474
      %v481 = vadd.s32 %v473, %v479
      %vm482 = vc.u32 %v480, %v476
      %v483 = vsel %vm482, 1, 0
      %v484 = vadd.s32 %v480, %v476
      %v485 = vadd.s32 %v481, %v483
      %v486 = vadd.s32 %v485, %v475
      %v487 = vadd.s32 %v486, %v477
      %v488 = vshrl.u32 %v487, 3
      %v489 = vmul.u32 %v488, 9
      %v490 = vsub.s32 %v466, %v489
      %v491 = vsub.s32 0, %v490
      %v492 = vsel %vm464, %v491, %v490
      %vm493 = vcmp.lt.s32.totalorder %v428, 0
      %v494 = vsub.s32 0, %v428
      %v495 = vsel %vm493, %v494, %v428
      %v496 = vand.u32 %v495, 65535
      %v497 = vshrl.u32 %v495, 16
      %v499 = vmul.u32 %v496, 14564
      %v500 = vmul.u32 %v496, 58254
      %v501 = vmul.u32 %v497, 14564
      %v502 = vmul.u32 %v497, 58254
      %v503 = vshll.u32 %v500, 16
      %v504 = vshrl.u32 %v500, 16
      %v505 = vshll.u32 %v501, 16
      %v506 = vshrl.u32 %v501, 16
      %vm507 = vc.u32 %v499, %v503
      %v508 = vsel %vm507, 1, 0
      %v509 = vadd.s32 %v499, %v503
      %v510 = vadd.s32 %v502, %v508
      %vm511 = vc.u32 %v509, %v505
      %v512 = vsel %vm511, 1, 0
      %v513 = vadd.s32 %v509, %v505
      %v514 = vadd.s32 %v510, %v512
      %v515 = vadd.s32 %v514, %v504
      %v516 = vadd.s32 %v515, %v506
      %v517 = vshrl.u32 %v516, 3
      %v518 = vmul.u32 %v517, 9
      %v519 = vsub.s32 %v495, %v518
      %v520 = vsub.s32 0, %v519
      %v521 = vsel %vm493, %v520, %v519
      %vm522 = vcmp.lt.s32.totalorder %v429, 0
      %v523 = vsub.s32 0, %v429
      %v524 = vsel %vm522, %v523, %v429
      %v525 = vand.u32 %v524, 65535
      %v526 = vshrl.u32 %v524, 16
      %v528 = vmul.u32 %v525, 14564
      %v529 = vmul.u32 %v525, 58254
      %v530 = vmul.u32 %v526, 14564
      %v531 = vmul.u32 %v526, 58254
      %v532 = vshll.u32 %v529, 16
      %v533 = vshrl.u32 %v529, 16
      %v534 = vshll.u32 %v530, 16
      %v535 = vshrl.u32 %v530, 16
      %vm536 = vc.u32 %v528, %v532
      %v537 = vsel %vm536, 1, 0
      %v538 = vadd.s32 %v528, %v532
      %v539 = vadd.s32 %v531, %v537
      %vm540 = vc.u32 %v538, %v534
      %v541 = vsel %vm540, 1, 0
      %v542 = vadd.s32 %v538, %v534
      %v543 = vadd.s32 %v539, %v541
      %v544 = vadd.s32 %v543, %v533
      %v545 = vadd.s32 %v544, %v535
      %v546 = vshrl.u32 %v545, 3
      %v547 = vmul.u32 %v546, 9
      %v548 = vsub.s32 %v524, %v547
      %v549 = vsub.s32 0, %v548
      %v550 = vsel %vm522, %v549, %v548
      %vm551 = vcmp.lt.s32.totalorder %v430, 0
      %v552 = vsub.s32 0, %v430
      %v553 = vsel %vm551, %v552, %v430
      %v554 = vand.u32 %v553, 65535
      %v555 = vshrl.u32 %v553, 16
      %v557 = vmul.u32 %v554, 14564
      %v558 = vmul.u32 %v554, 58254
      %v559 = vmul.u32 %v555, 14564
      %v560 = vmul.u32 %v555, 58254
      %v561 = vshll.u32 %v558, 16
      %v562 = vshrl.u32 %v558, 16
      %v563 = vshll.u32 %v559, 16
      %v564 = vshrl.u32 %v559, 16
      %vm565 = vc.u32 %v557, %v561
      %v566 = vsel %vm565, 1, 0
      %v567 = vadd.s32 %v557, %v561
      %v568 = vadd.s32 %v560, %v566
      %vm569 = vc.u32 %v567, %v563
      %v570 = vsel %vm569, 1, 0
      %v571 = vadd.s32 %v567, %v563
      %v572 = vadd.s32 %v568, %v570
      %v573 = vadd.s32 %v572, %v562
      %v574 = vadd.s32 %v573, %v564
      %v575 = vshrl.u32 %v574, 3
      %v576 = vmul.u32 %v575, 9
      %v577 = vsub.s32 %v553, %v576
      %v578 = vsub.s32 0, %v577
      %v579 = vsel %vm551, %v578, %v577
      %vm580 = vcmp.lt.s32.totalorder %v431, 0
      %v581 = vsub.s32 0, %v431
      %v582 = vsel %vm580, %v581, %v431
      %v583 = vand.u32 %v582, 65535
      %v584 = vshrl.u32 %v582, 16
      %v586 = vmul.u32 %v583, 14564
      %v587 = vmul.u32 %v583, 58254
      %v588 = vmul.u32 %v584, 14564
      %v589 = vmul.u32 %v584, 58254
      %v590 = vshll.u32 %v587, 16
      %v591 = vshrl.u32 %v587, 16
      %v592 = vshll.u32 %v588, 16
      %v593 = vshrl.u32 %v588, 16
      %vm594 = vc.u32 %v586, %v590
      %v595 = vsel %vm594, 1, 0
      %v596 = vadd.s32 %v586, %v590
      %v597 = vadd.s32 %v589, %v595
      %vm598 = vc.u32 %v596, %v592
      %v599 = vsel %vm598, 1, 0
      %v600 = vadd.s32 %v596, %v592
      %v601 = vadd.s32 %v597, %v599
      %v602 = vadd.s32 %v601, %v591
      %v603 = vadd.s32 %v602, %v593
      %v604 = vshrl.u32 %v603, 3
      %v605 = vmul.u32 %v604, 9
      %v606 = vsub.s32 %v582, %v605
      %v607 = vsub.s32 0, %v606
      %v608 = vsel %vm580, %v607, %v606
      %vm609 = vcmp.lt.s32.totalorder %v432, 0
      %v610 = vsub.s32 0, %v432
      %v611 = vsel %vm609, %v610, %v432
      %v612 = vand.u32 %v611, 65535
      %v613 = vshrl.u32 %v611, 16
      %v615 = vmul.u32 %v612, 14564
      %v616 = vmul.u32 %v612, 58254
      %v617 = vmul.u32 %v613, 14564
      %v618 = vmul.u32 %v613, 58254
      %v619 = vshll.u32 %v616, 16
      %v620 = vshrl.u32 %v616, 16
      %v621 = vshll.u32 %v617, 16
      %v622 = vshrl.u32 %v617, 16
      %vm623 = vc.u32 %v615, %v619
      %v624 = vsel %vm623, 1, 0
      %v625 = vadd.s32 %v615, %v619
      %v626 = vadd.s32 %v618, %v624
      %vm627 = vc.u32 %v625, %v621
      %v628 = vsel %vm627, 1, 0
      %v629 = vadd.s32 %v625, %v621
      %v630 = vadd.s32 %v626, %v628
      %v631 = vadd.s32 %v630, %v620
      %v632 = vadd.s32 %v631, %v622
      %v633 = vshrl.u32 %v632, 3
      %v634 = vmul.u32 %v633, 9
      %v635 = vsub.s32 %v611, %v634
      %v636 = vsub.s32 0, %v635
      %v637 = vsel %vm609, %v636, %v635
      %vm638 = vcmp.lt.s32.totalorder %v433, 0
      %v639 = vsub.s32 0, %v433
      %v640 = vsel %vm638, %v639, %v433
      %v641 = vand.u32 %v640, 65535
      %v642 = vshrl.u32 %v640, 16
      %v644 = vmul.u32 %v641, 14564
      %v645 = vmul.u32 %v641, 58254
      %v646 = vmul.u32 %v642, 14564
      %v647 = vmul.u32 %v642, 58254
      %v648 = vshll.u32 %v645, 16
      %v649 = vshrl.u32 %v645, 16
      %v650 = vshll.u32 %v646, 16
      %v651 = vshrl.u32 %v646, 16
      %vm652 = vc.u32 %v644, %v648
      %v653 = vsel %vm652, 1, 0
      %v654 = vadd.s32 %v644, %v648
      %v655 = vadd.s32 %v647, %v653
      %vm656 = vc.u32 %v654, %v650
      %v657 = vsel %vm656, 1, 0
      %v658 = vadd.s32 %v654, %v650
      %v659 = vadd.s32 %v655, %v657
      %v660 = vadd.s32 %v659, %v649
      %v661 = vadd.s32 %v660, %v651
      %v662 = vshrl.u32 %v661, 3
      %v663 = vmul.u32 %v662, 9
      %v664 = vsub.s32 %v640, %v663
      %v665 = vsub.s32 0, %v664
      %v666 = vsel %vm638, %v665, %v664
      %vm667 = vcmp.lt.s32.totalorder %v434, 0
      %v668 = vsub.s32 0, %v434
      %v669 = vsel %vm667, %v668, %v434
      %v670 = vand.u32 %v669, 65535
      %v671 = vshrl.u32 %v669, 16
      %v673 = vmul.u32 %v670, 14564
      %v674 = vmul.u32 %v670, 58254
      %v675 = vmul.u32 %v671, 14564
      %v676 = vmul.u32 %v671, 58254
      %v677 = vshll.u32 %v674, 16
      %v678 = vshrl.u32 %v674, 16
      %v679 = vshll.u32 %v675, 16
      %v680 = vshrl.u32 %v675, 16
      %vm681 = vc.u32 %v673, %v677
      %v682 = vsel %vm681, 1, 0
      %v683 = vadd.s32 %v673, %v677
      %v684 = vadd.s32 %v676, %v682
      %vm685 = vc.u32 %v683, %v679
      %v686 = vsel %vm685, 1, 0
      %v687 = vadd.s32 %v683, %v679
      %v688 = vadd.s32 %v684, %v686
      %v689 = vadd.s32 %v688, %v678
      %v690 = vadd.s32 %v689, %v680
      %v691 = vshrl.u32 %v690, 3
      %v692 = vmul.u32 %v691, 9
      %v693 = vsub.s32 %v669, %v692
      %v694 = vsub.s32 0, %v693
      %v695 = vsel %vm667, %v694, %v693
      %vm696 = vcmp.ne.s32.totalorder %v463, 0
      %vm697 = vcmp.ne.s32.totalorder %v492, 0
      %vm698 = vcmp.ne.s32.totalorder %v521, 0
      %vm699 = vcmp.ne.s32.totalorder %v550, 0
      %vm700 = vcmp.ne.s32.totalorder %v579, 0
      %vm701 = vcmp.ne.s32.totalorder %v608, 0
      %vm702 = vcmp.ne.s32.totalorder %v637, 0
      %vm703 = vcmp.ne.s32.totalorder %v666, 0
      %vm704 = vcmp.ne.s32.totalorder %v695, 0
      %vm705 = vcmp.lt.s32.totalorder %v463, 0
      %vm706 = vcmp.lt.s32.totalorder %v492, 0
      %vm707 = vcmp.lt.s32.totalorder %v521, 0
      %vm708 = vcmp.lt.s32.totalorder %v550, 0
      %vm709 = vcmp.lt.s32.totalorder %v579, 0
      %vm710 = vcmp.lt.s32.totalorder %v608, 0
      %vm711 = vcmp.lt.s32.totalorder %v637, 0
      %vm712 = vcmp.lt.s32.totalorder %v666, 0
      %vm713 = vcmp.lt.s32.totalorder %v695, 0
      %vm714 = vmand %vm705, %vm696
      %vm715 = vmand %vm706, %vm697
      %vm716 = vmand %vm707, %vm698
      %vm717 = vmand %vm708, %vm699
      %vm718 = vmand %vm709, %vm700
      %vm719 = vmand %vm710, %vm701
      %vm720 = vmand %vm711, %vm702
      %vm721 = vmand %vm712, %vm703
      %vm722 = vmand %vm713, %vm704
      %v723 = vadd.s32 %v463, 9
      %v724 = vadd.s32 %v492, 9
      %v725 = vadd.s32 %v521, 9
      %v726 = vadd.s32 %v550, 9
      %v727 = vadd.s32 %v579, 9
      %v728 = vadd.s32 %v608, 9
      %v729 = vadd.s32 %v637, 9
      %v730 = vadd.s32 %v666, 9
      %v731 = vadd.s32 %v695, 9
      %v732 = vsel %vm714, %v723, %v463
      %v733 = vsel %vm715, %v724, %v492
      %v734 = vsel %vm716, %v725, %v521
      %v735 = vsel %vm717, %v726, %v550
      %v736 = vsel %vm718, %v727, %v579
      %v737 = vsel %vm719, %v728, %v608
      %v738 = vsel %vm720, %v729, %v637
      %v739 = vsel %vm721, %v730, %v666
      %v740 = vsel %vm722, %v731, %v695
      %vm741 = vcmp.lt.s32.totalorder %v732, 8
      %vm742 = vcmp.lt.s32.totalorder %v733, 8
      %vm743 = vcmp.lt.s32.totalorder %v734, 8
      %vm744 = vcmp.lt.s32.totalorder %v735, 8
      %vm745 = vcmp.lt.s32.totalorder %v736, 8
      %vm746 = vcmp.lt.s32.totalorder %v737, 8
      %vm747 = vcmp.lt.s32.totalorder %v738, 8
      %vm748 = vcmp.lt.s32.totalorder %v739, 8
      %vm749 = vcmp.lt.s32.totalorder %v740, 8
      %v750 = vsel %vm741, 1, 0
      %v751 = vsel %vm742, 1, 0
      %v752 = vsel %vm743, 1, 0
      %v753 = vsel %vm744, 1, 0
      %v754 = vsel %vm745, 1, 0
      %v755 = vsel %vm746, 1, 0
      %v756 = vsel %vm747, 1, 0
      %v757 = vsel %vm748, 1, 0
      %v758 = vsel %vm749, 1, 0
      %vm759 = vcmp.eq.s32.totalorder %v750, 1
      %vm760 = vcmp.eq.s32.totalorder %v751, 1
      %vm761 = vcmp.eq.s32.totalorder %v752, 1
      %vm762 = vcmp.eq.s32.totalorder %v753, 1
      %vm763 = vcmp.eq.s32.totalorder %v754, 1
      %vm764 = vcmp.eq.s32.totalorder %v755, 1
      %vm765 = vcmp.eq.s32.totalorder %v756, 1
      %vm766 = vcmp.eq.s32.totalorder %v757, 1
      %vm767 = vcmp.eq.s32.totalorder %v758, 1
      %v768 = vsel %vm759, %v402, 0.0
      %v769 = vsel %vm760, %v404, 0.0
      %v770 = vsel %vm761, %v407, 0.0
      %v771 = vsel %vm762, %v409, 0.0
      %v772 = vsel %vm763, %v412, 0.0
      %v773 = vsel %vm764, %v414, 0.0
      %v774 = vsel %vm765, %v417, 0.0
      %v775 = vsel %vm766, %v419, 0.0
      %v776 = vsel %vm767, %v422, 0.0
      %v777 = vadd.f32 %v768, %v769
      %v778 = vadd.f32 %v777, %v770
      %v779 = vadd.f32 %v778, %v771
      %v780 = vadd.f32 %v779, %v772
      %v781 = vadd.f32 %v780, %v773
      %v782 = vadd.f32 %v781, %v774
      %v783 = vadd.f32 %v782, %v775
      %v784 = vadd.f32 %v783, %v776
      %v785 = vrot.slane %v784, 4
      %v786 = vadd.f32 %v784, %v785
      %v787 = vrot.slane %v786, 2
      %v788 = vadd.f32 %v786, %v787
      %v789 = vrot.slane %v788, 1
      %v790 = vadd.f32 %v788, %v789
      %v791 = vmul.f32 %v768, %v768
      %v792 = vmul.f32 %v769, %v769
      %v793 = vmul.f32 %v770, %v770
      %v794 = vmul.f32 %v771, %v771
      %v795 = vmul.f32 %v772, %v772
      %v796 = vmul.f32 %v773, %v773
      %v797 = vmul.f32 %v774, %v774
      %v798 = vmul.f32 %v775, %v775
      %v799 = vmul.f32 %v776, %v776
      %v800 = vadd.f32 %v791, %v792
      %v801 = vadd.f32 %v800, %v793
      %v802 = vadd.f32 %v801, %v794
      %v803 = vadd.f32 %v802, %v795
      %v804 = vadd.f32 %v803, %v796
      %v805 = vadd.f32 %v804, %v797
      %v806 = vadd.f32 %v805, %v798
      %v807 = vadd.f32 %v806, %v799
      %v808 = vrot.slane %v807, 4
      %v809 = vadd.f32 %v807, %v808
      %v810 = vrot.slane %v809, 2
      %v811 = vadd.f32 %v809, %v810
      %v812 = vrot.slane %v811, 1
      %v813 = vadd.f32 %v811, %v812
      %v814 = vmul.f32 %v790, 0.015625
      %v815 = vmul.f32 %v813, 0.015625
      %v816 = vmul.f32 %v814, %v814
      %v817 = vsub.f32 %v815, %v816
      %v818 = vmax.f32 %v817, 0.0
      %v819 = vsub.f32 %v768, %v814
      %v820 = vsub.f32 %v769, %v814
      %v821 = vsub.f32 %v770, %v814
      %v822 = vsub.f32 %v771, %v814
      %v823 = vsub.f32 %v772, %v814
      %v824 = vsub.f32 %v773, %v814
      %v825 = vsub.f32 %v774, %v814
      %v826 = vsub.f32 %v775, %v814
      %v827 = vsub.f32 %v776, %v814
      %v828 = vadd.f32 %v818, 1e-05
      %v829 = vrsqrt.pop %v828
      %v830 = vmul.f32 %v829, %v828
      %v831 = vmul.f32 %v830, %v829
      %v832 = vmul.f32 0.5, %v831
      %v833 = vsub.f32 1.5, %v832
      %v834 = vmul.f32 %v829, %v833
      %vm835 = vweird.f32 %v828
      %vm836 = vweird.f32 %v829
      %vm837 = vmor %vm835, %vm836
      %v838 = vsel %vm837, %v829, %v834
      %v839 = vmul.f32 %v819, %v838
      %v840 = vmul.f32 %v820, %v838
      %v841 = vmul.f32 %v821, %v838
      %v842 = vmul.f32 %v822, %v838
      %v843 = vmul.f32 %v823, %v838
      %v844 = vmul.f32 %v824, %v838
      %v845 = vmul.f32 %v825, %v838
      %v846 = vmul.f32 %v826, %v838
      %v847 = vmul.f32 %v827, %v838
      %vm848 = vcmp.ge.f32.partialorder %v839, 0.0
      %vm849 = vcmp.ge.f32.partialorder %v840, 0.0
      %vm850 = vcmp.ge.f32.partialorder %v841, 0.0
      %vm851 = vcmp.ge.f32.partialorder %v842, 0.0
      %vm852 = vcmp.ge.f32.partialorder %v843, 0.0
      %vm853 = vcmp.ge.f32.partialorder %v844, 0.0
      %vm854 = vcmp.ge.f32.partialorder %v845, 0.0
      %vm855 = vcmp.ge.f32.partialorder %v846, 0.0
      %vm856 = vcmp.ge.f32.partialorder %v847, 0.0
      %v857 = vmul.f32 %v839, 0.2
      %v858 = vmul.f32 %v840, 0.2
      %v859 = vmul.f32 %v841, 0.2
      %v860 = vmul.f32 %v842, 0.2
      %v861 = vmul.f32 %v843, 0.2
      %v862 = vmul.f32 %v844, 0.2
      %v863 = vmul.f32 %v845, 0.2
      %v864 = vmul.f32 %v846, 0.2
      %v865 = vmul.f32 %v847, 0.2
      %v866 = vsel %vm848, %v839, %v857
      %v867 = vsel %vm849, %v840, %v858
      %v868 = vsel %vm850, %v841, %v859
      %v869 = vsel %vm851, %v842, %v860
      %v870 = vsel %vm852, %v843, %v861
      %v871 = vsel %vm853, %v844, %v862
      %v872 = vsel %vm854, %v845, %v863
      %v873 = vsel %vm855, %v846, %v864
      %v874 = vsel %vm856, %v847, %v865
      %875 = vst [vmem:[%s143] sm:$0xff] %v866
      %876 = vst [vmem:[%s143 + $0x8] sm:$0xff] %v867
      %877 = vst [vmem:[%s143 + $0x10] sm:$0xff] %v868
      %878 = vst [vmem:[%s143 + $0x18] sm:$0xff] %v869
      %879 = vst [vmem:[%s143 + $0x20] sm:$0xff] %v870
      %880 = vst [vmem:[%s143 + $0x28] sm:$0xff] %v871
      %881 = vst [vmem:[%s143 + $0x30] sm:$0xff] %v872
      %882 = vst [vmem:[%s143 + $0x38] sm:$0xff] %v873
      %883 = vst [vmem:[%s143 + $0x40] sm:$0xff] %v874
      %p884 = scmp.lt.s32.totalorder %s13, 1
      %s885 = scalar_select %p884, %s13, 1
      %s886 = smul.addr %s885, 9
      %s887 = smul.addr %s886, 8
      %s888 = scalar_lea.vmem %s2, %s887
      // Predicated region
      $region29: #{unet_down_forward.1} parent=27 // pred_check
        %p889 = pneg %p78
      $region30: #{unet_down_forward.1} parent=27 // pred_check_branch
        %891 = sbr.rel (%p889) target = $region32
      $region31: #{unet_down_forward.1} parent=27 // pred_region
        _
      $region32: #{unet_down_forward.1} parent=27 // pred_fallthru
        _
    $region28: #{unet_down_forward.1} parent=5 // pred_fallthru
      _
    %p892 = scmp.le.s32.totalorder 2, %s8
    // Predicated region
    $region33: #{unet_down_forward.1} parent=5 // pred_check
      %p893 = pneg %p892
    $region34: #{unet_down_forward.1} parent=5 // pred_check_branch
      %895 = sbr.rel (%p893) target = $region36
    $region35: #{unet_down_forward.1} parent=5 // pred_region
      %s896 = ssub.s32 %s8, 2
      // Predicated region
      $region37: #{unet_down_forward.1} parent=35 // pred_check
        %p897 = pneg %p84
      $region38: #{unet_down_forward.1} parent=35 // pred_check_branch
        %899 = sbr.rel (%p897) target = $region40
      $region39: #{unet_down_forward.1} parent=35 // pred_region
        %p900 = scmp.lt.s32.totalorder %s14, 1
        %s901 = scalar_select %p900, %s14, 1
        %s902 = smul.addr %s901, 9
        %s903 = smul.addr %s902, 8
        %s904 = scalar_lea.vmem %s2, %s903
      $region40: #{unet_down_forward.1} parent=35 // pred_fallthru
        _
    $region36: #{unet_down_forward.1} parent=5 // pred_fallthru
      _
  $region6: #{unet_down_forward.1} parent=0 // loop_footer
    %s12 = sadd.s32 1, %s8
  $region7: #{unet_down_forward.1} parent=0 // loop_footer_branch
    %7 = sbr.rel target = $region3
  $region8: #{unet_down_forward.1} parent=0 // loop_exit
    _

</llo_original>
